<compile_context>
chip_gen: v7x
topology: tpu7x:2x2x1
jax: 0.10.0
libtpu: 0.0.40
codegen_flags: <defaults>
</compile_context>

<pallas_src>
import jax
import jax.numpy as jnp
from jax.experimental import pallas as pl
from jax.experimental.pallas import tpu as pltpu

_LANE = 128


def _gelu(x):
    # exact (erf-based) GELU, matching torch.nn.GELU default
    return 0.5 * x * (1.0 + jax.lax.erf(x * jnp.float32(0.7071067811865476)))


def _round_up(x, m):
    return ((x + m - 1) // m) * m


def _pick_tile(total, max_tile):
    """Largest multiple of 128 that divides `total` (itself a multiple of 128)."""
    t = min(total, max_tile)
    t -= t % _LANE
    while total % t:
        t -= _LANE
    return t


def _fusion_kernel(
    exp_ref,                    # (B, tgi)     bf16  gene tile of orig_exp
    w_e1_ref,                   # (tgi, D)     bf16  matching tile of exp-encoder Linear
    b_e1_ref,                   # (1, D)       f32
    img_ref,                    # (B, Cin, HW) bf16  image, HW on lanes
    w_enc_ref, b_enc_ref,       # (D, Cin) bf16, (D, 1) f32   1x1-conv stand-in encoder
    w_m1_ref, b_m1_ref,         # (D, D) bf16, (1, D) f32     MLPBlock lin1
    w_m2_ref, b_m2_ref,         # (D, D) bf16, (1, D) f32     MLPBlock lin2
    w_ln_e_ref, w_ln_i_ref,     # (D, 4D) bf16 x2             self.ln weight split in halves
    b_ln_ref,                   # (1, 4D) f32
    gamma_ref, beta_ref,        # (1, 4D) f32  LayerNorm affine
    zn_ref,                     # (B, 4D) f32  output: ReLU(LayerNorm(concat-linear))
    h_acc,                      # (B, D)  f32  VMEM scratch: exp @ W_e1 accumulator
):
    k = pl.program_id(0)
    nk = pl.num_programs(0)

    @pl.when(k == 0)
    def _init():
        h_acc[...] = jnp.zeros_like(h_acc)

    # streamed partial product of the exp-encoder first Linear (gene-tile reduction axis)
    h_acc[...] += jnp.dot(exp_ref[...], w_e1_ref[...],
                          preferred_element_type=jnp.float32)

    @pl.when(k == nk - 1)
    def _finalize():
        # ---- expression branch: bias + MLPBlock (Linear -> GELU -> Linear) ----
        h = h_acc[...] + b_e1_ref[...]                                   # (B, D) f32
        m = jnp.dot(h.astype(jnp.bfloat16), w_m1_ref[...],
                    preferred_element_type=jnp.float32) + b_m1_ref[...]
        m = _gelu(m)
        exp_emb = jnp.dot(m.astype(jnp.bfloat16), w_m2_ref[...],
                          preferred_element_type=jnp.float32) + b_m2_ref[...]

        # ---- image branch: 1x1-conv stand-in + ReLU, then global average pool ----
        img = img_ref[...]                                               # (B, Cin, HW)
        b_dim = img.shape[0]
        d_dim = w_enc_ref.shape[0]
        # pooled per-image columns land in a lane-padded (D, 128) buffer so that the
        # sublane<->lane swap below is a fully aligned f32 transpose.
        col = jax.lax.broadcasted_iota(jnp.int32, (d_dim, _LANE), 1)
        emb_cols = jnp.zeros((d_dim, _LANE), jnp.float32)
        for b in range(b_dim):            # static unroll: one 2-D MXU matmul per image
            f = jnp.dot(w_enc_ref[...], img[b],
                        preferred_element_type=jnp.float32)              # (D, HW), lane-dense
            f = jnp.maximum(f + b_enc_ref[...], 0.0)                     # bias + ReLU
            pooled = jnp.mean(f, axis=-1, keepdims=True)                 # (D, 1) avg pool
            emb_cols = emb_cols + jnp.where(col == b, pooled, 0.0)
        img_emb = jnp.transpose(emb_cols)[:b_dim, :]                     # (B, D) f32

        # ---- concat([exp_emb, img_emb]) @ W_ln == exp_emb @ W_top + img_emb @ W_bot ----
        z = (jnp.dot(exp_emb.astype(jnp.bfloat16), w_ln_e_ref[...],
                     preferred_element_type=jnp.float32)
             + jnp.dot(img_emb.astype(jnp.bfloat16), w_ln_i_ref[...],
                       preferred_element_type=jnp.float32)
             + b_ln_ref[...])                                            # (B, 4D) f32

        # ---- LayerNorm (eps=1e-5, torch default) + ReLU ----
        mu = jnp.mean(z, axis=-1, keepdims=True)
        var = jnp.mean((z - mu) ** 2, axis=-1, keepdims=True)
        zn = (z - mu) * jax.lax.rsqrt(var + 1e-5)
        zn = zn * gamma_ref[...] + beta_ref[...]
        zn_ref[...] = jnp.maximum(zn, 0.0).astype(zn_ref.dtype)


def _final_linear_kernel(zn_ref, w_fin_ref, b_fin_ref, out_ref):
    # (B, 4D) @ (4D, tgo) gene tile of the final Linear; bf16 MXU, f32 accumulate.
    out_ref[...] = (jnp.dot(zn_ref[...].astype(jnp.bfloat16), w_fin_ref[...],
                            preferred_element_type=jnp.float32)
                    + b_fin_ref[...]).astype(out_ref.dtype)


def concat_model_forward(img, orig_exp, params):
    """img: (B, Cin, H, W) float32 NCHW; orig_exp: (B, gene_num) float32."""
    B, Cin, H, W = img.shape
    HW = H * W
    G = orig_exp.shape[1]
    D = params['w_e1'].shape[1]            # attention_dim
    D4 = 4 * D

    bf16, f32 = jnp.bfloat16, jnp.float32

    # lane-dense image layout straight out of NCHW: (B, Cin, HW), HW on lanes (no transpose)
    img_l = img.reshape(B, Cin, HW).astype(bf16)

    # zero-pad gene dims to multiples of 128 (lane-dense blocks / unmasked stores);
    # exact because the matching weight rows / columns are zero-padded too.
    Gi = _round_up(G, _LANE)
    Go = _round_up(G, _LANE)
    exp_p = jnp.pad(orig_exp, ((0, 0), (0, Gi - G))).astype(bf16)
    w_e1 = jnp.pad(params['w_e1'], ((0, Gi - G), (0, 0))).astype(bf16)
    w_fin = jnp.pad(params['w_fin'], ((0, 0), (0, Go - G))).astype(bf16)
    b_fin = jnp.pad(params['b_fin'], ((0, 0), (0, Go - G))).astype(f32)

    # matmul weights stream as bf16; biases / LayerNorm affine stay f32.
    w_enc = params['w_enc'].astype(bf16)   # (D, Cin)
    b_enc = params['b_enc'].astype(f32)    # (D, 1)
    b_e1 = params['b_e1'].astype(f32)
    w_m1, b_m1 = params['w_m1'].astype(bf16), params['b_m1'].astype(f32)
    w_m2, b_m2 = params['w_m2'].astype(bf16), params['b_m2'].astype(f32)
    w_ln_e = params['w_ln_e'].astype(bf16)
    w_ln_i = params['w_ln_i'].astype(bf16)
    b_ln = params['b_ln'].astype(f32)
    gamma = params['gamma'].astype(f32)
    beta = params['beta'].astype(f32)

    # -------- kernel 1: embeddings + concat-linear + LayerNorm + ReLU --------
    tgi = _pick_tile(Gi, 1024)             # input-gene reduction tile
    nk = Gi // tgi

    zn = pl.pallas_call(
        _fusion_kernel,
        out_shape=jax.ShapeDtypeStruct((B, D4), f32),
        grid=(nk,),
        in_specs=[
            pl.BlockSpec((B, tgi), lambda k: (0, k)),          # orig_exp gene tile
            pl.BlockSpec((tgi, D), lambda k: (k, 0)),          # w_e1 gene tile (streamed)
            pl.BlockSpec((1, D), lambda k: (0, 0)),            # b_e1
            pl.BlockSpec((B, Cin, HW), lambda k: (0, 0, 0)),   # image (resident)
            pl.BlockSpec((D, Cin), lambda k: (0, 0)),          # w_enc
            pl.BlockSpec((D, 1), lambda k: (0, 0)),            # b_enc
            pl.BlockSpec((D, D), lambda k: (0, 0)),            # w_m1
            pl.BlockSpec((1, D), lambda k: (0, 0)),            # b_m1
            pl.BlockSpec((D, D), lambda k: (0, 0)),            # w_m2
            pl.BlockSpec((1, D), lambda k: (0, 0)),            # b_m2
            pl.BlockSpec((D, D4), lambda k: (0, 0)),           # w_ln (exp half)
            pl.BlockSpec((D, D4), lambda k: (0, 0)),           # w_ln (img half)
            pl.BlockSpec((1, D4), lambda k: (0, 0)),           # b_ln
            pl.BlockSpec((1, D4), lambda k: (0, 0)),           # LN gamma
            pl.BlockSpec((1, D4), lambda k: (0, 0)),           # LN beta
        ],
        out_specs=pl.BlockSpec((B, D4), lambda k: (0, 0)),
        scratch_shapes=[pltpu.VMEM((B, D), f32)],              # h accumulator
        compiler_params=pltpu.CompilerParams(
            dimension_semantics=("arbitrary",)),               # reduction axis
    )(exp_p, w_e1, b_e1, img_l, w_enc, b_enc,
      w_m1, b_m1, w_m2, b_m2, w_ln_e, w_ln_i, b_ln, gamma, beta)

    # -------- kernel 2: final Linear(4D -> gene_num), tiled over genes --------
    tgo = _pick_tile(Go, 1024)
    nj = Go // tgo

    out_p = pl.pallas_call(
        _final_linear_kernel,
        out_shape=jax.ShapeDtypeStruct((B, Go), f32),
        grid=(nj,),
        in_specs=[
            pl.BlockSpec((B, D4), lambda j: (0, 0)),           # zn (resident)
            pl.BlockSpec((D4, tgo), lambda j: (0, j)),         # w_fin gene tile (streamed)
            pl.BlockSpec((1, tgo), lambda j: (0, j)),          # b_fin gene tile
        ],
        out_specs=pl.BlockSpec((B, tgo), lambda j: (0, j)),    # lane-dense output tile
        compiler_params=pltpu.CompilerParams(
            dimension_semantics=("parallel",)),                # shards across TCs on v7x
    )(zn, w_fin, b_fin)

    return out_p[:, :G]


if __name__ == "__main__":
    key = jax.random.PRNGKey(0)
    # Small shapes consistent with the module (attention_dim scaled 512 -> 32)
    B, Cin, H, W = 2, 4, 16, 16
    D = 32    # attention_dim
    G = 64    # gene_num

    ks = jax.random.split(key, 16)

    def init(k, shape, fan_in):
        bound = 1.0 / jnp.sqrt(jnp.float32(fan_in))
        return jax.random.uniform(k, shape, jnp.float32, -bound, bound)

    params = {
        'w_enc':  init(ks[0], (D, Cin), Cin),       # stand-in 1x1 conv weight (out, in)
        'b_enc':  init(ks[1], (D, 1), Cin),
        'w_e1':   init(ks[2], (G, D), G),           # exp_encoder Linear
        'b_e1':   init(ks[3], (1, D), G),
        'w_m1':   init(ks[4], (D, D), D),           # MLPBlock lin1
        'b_m1':   init(ks[5], (1, D), D),
        'w_m2':   init(ks[6], (D, D), D),           # MLPBlock lin2
        'b_m2':   init(ks[7], (1, D), D),
        'w_ln_e': init(ks[8], (D, 4 * D), 2 * D),   # self.ln weight, exp_emb half
        'w_ln_i': init(ks[9], (D, 4 * D), 2 * D),   # self.ln weight, img_emb half
        'b_ln':   init(ks[10], (1, 4 * D), 2 * D),
        'gamma':  jnp.ones((1, 4 * D), jnp.float32),
        'beta':   jnp.zeros((1, 4 * D), jnp.float32),
        'w_fin':  init(ks[11], (4 * D, G), 4 * D),  # final Linear
        'b_fin':  init(ks[12], (1, G), 4 * D),
    }

    img = jax.random.normal(ks[13], (B, Cin, H, W), jnp.float32)
    orig_exp = jax.random.normal(ks[14], (B, G), jnp.float32)

    out = jax.jit(concat_model_forward)(img, orig_exp, params)
    jax.block_until_ready(out)
    assert out.shape == (B, G) and out.dtype == jnp.float32
    print("KERNEL_OK")
</pallas_src>

<mosaic_0001>
module attributes {stable_mosaic.version = 11 : i64} {
  func.func @_final_linear_kernel(%arg0: i32, %arg1: memref<2x128xf32, #tpu.memory_space<vmem>>, %arg2: memref<128x128xbf16, #tpu.memory_space<vmem>>, %arg3: memref<1x128xf32, #tpu.memory_space<vmem>>, %arg4: memref<2x128xf32, #tpu.memory_space<vmem>>) attributes {dimension_semantics = [#tpu.dimension_semantics<parallel>], iteration_bounds = array<i64: 1>, scalar_prefetch = 0 : i64, scratch_operands = 0 : i64, tpu.core_type = #tpu.core_type<tc>, window_params = [{pipeline_mode = #tpu.pipeline_mode<synchronous>, transform_indices = @transform_0, window_bounds = array<i64: 2, 128>}, {transform_indices = @transform_1, window_bounds = array<i64: 128, 128>}, {transform_indices = @transform_2, window_bounds = array<i64: 1, 128>}, {transform_indices = @transform_3, window_bounds = array<i64: 2, 128>}]} {
    %c0 = arith.constant 0 : index
    %c0_0 = arith.constant 0 : index
    %0 = vector.load %arg1[%c0, %c0_0] : memref<2x128xf32, #tpu.memory_space<vmem>>, vector<2x128xf32>
    %1 = arith.truncf %0 : vector<2x128xf32> to vector<2x128xbf16>
    %c0_1 = arith.constant 0 : index
    %c0_2 = arith.constant 0 : index
    %2 = vector.load %arg2[%c0_1, %c0_2] : memref<128x128xbf16, #tpu.memory_space<vmem>>, vector<128x128xbf16>
    %cst = arith.constant dense<0.000000e+00> : vector<2x128xf32>
    %3 = tpu.matmul %1, %2, %cst {dimension_numbers = #tpu.dot_dimension_numbers<[1], [0], [0], [1], [0, 0, 1, 1], [], []>} : vector<2x128xbf16>, vector<128x128xbf16>, vector<2x128xf32> -> vector<2x128xf32>
    %c0_3 = arith.constant 0 : index
    %c0_4 = arith.constant 0 : index
    %4 = vector.load %arg3[%c0_3, %c0_4] : memref<1x128xf32, #tpu.memory_space<vmem>>, vector<1x128xf32>
    %5 = vector.broadcast %4 : vector<1x128xf32> to vector<2x128xf32>
    %6 = arith.addf %3, %5 : vector<2x128xf32>
    %c0_5 = arith.constant 0 : index
    %c0_6 = arith.constant 0 : index
    %7 = vector.load %arg4[%c0_5, %c0_6] : memref<2x128xf32, #tpu.memory_space<vmem>>, vector<2x128xf32>
    tpu.vector_store %arg4[%c0_5, %c0_6], %6 {strides = array<i32>} : memref<2x128xf32, #tpu.memory_space<vmem>>, vector<2x128xf32>,
    return
  }
  func.func @transform_0(%arg0: i32) -> (i32, i32) {
    %c0_i32 = arith.constant 0 : i32
    %c0_i32_0 = arith.constant 0 : i32
    %c0_i32_1 = arith.constant 0 : i32
    return %c0_i32, %c0_i32_0 : i32, i32
  }
  func.func @transform_1(%arg0: i32) -> (i32, i32) {
    %c0_i32 = arith.constant 0 : i32
    %c0_i32_0 = arith.constant 0 : i32
    return %c0_i32, %arg0 : i32, i32
  }
  func.func @transform_2(%arg0: i32) -> (i32, i32) {
    %c0_i32 = arith.constant 0 : i32
    %c0_i32_0 = arith.constant 0 : i32
    return %c0_i32, %arg0 : i32, i32
  }
  func.func @transform_3(%arg0: i32) -> (i32, i32) {
    %c0_i32 = arith.constant 0 : i32
    %c0_i32_0 = arith.constant 0 : i32
    return %c0_i32, %arg0 : i32, i32
  }
}

module attributes {stable_mosaic.version = 11 : i64} {
  func.func @_fusion_kernel(%arg0: i32, %arg1: memref<2x128xbf16, #tpu.memory_space<vmem>>, %arg2: memref<128x32xbf16, #tpu.memory_space<vmem>>, %arg3: memref<1x32xf32, #tpu.memory_space<vmem>>, %arg4: memref<2x4x256xbf16, #tpu.memory_space<vmem>>, %arg5: memref<32x4xbf16, #tpu.memory_space<vmem>>, %arg6: memref<32x1xf32, #tpu.memory_space<vmem>>, %arg7: memref<32x32xbf16, #tpu.memory_space<vmem>>, %arg8: memref<1x32xf32, #tpu.memory_space<vmem>>, %arg9: memref<32x32xbf16, #tpu.memory_space<vmem>>, %arg10: memref<1x32xf32, #tpu.memory_space<vmem>>, %arg11: memref<32x128xbf16, #tpu.memory_space<vmem>>, %arg12: memref<32x128xbf16, #tpu.memory_space<vmem>>, %arg13: memref<1x128xf32, #tpu.memory_space<vmem>>, %arg14: memref<1x128xf32, #tpu.memory_space<vmem>>, %arg15: memref<1x128xf32, #tpu.memory_space<vmem>>, %arg16: memref<2x128xf32, #tpu.memory_space<vmem>>, %arg17: memref<2x32xf32, #tpu.memory_space<vmem>>) attributes {dimension_semantics = [#tpu.dimension_semantics<arbitrary>], iteration_bounds = array<i64: 1>, scalar_prefetch = 0 : i64, scratch_operands = 1 : i64, tpu.core_type = #tpu.core_type<tc>, window_params = [{transform_indices = @transform_0, window_bounds = array<i64: 2, 128>}, {transform_indices = @transform_1, window_bounds = array<i64: 128, 32>}, {pipeline_mode = #tpu.pipeline_mode<synchronous>, transform_indices = @transform_2, window_bounds = array<i64: 1, 32>}, {pipeline_mode = #tpu.pipeline_mode<synchronous>, transform_indices = @transform_3, window_bounds = array<i64: 2, 4, 256>}, {pipeline_mode = #tpu.pipeline_mode<synchronous>, transform_indices = @transform_4, window_bounds = array<i64: 32, 4>}, {pipeline_mode = #tpu.pipeline_mode<synchronous>, transform_indices = @transform_5, window_bounds = array<i64: 32, 1>}, {pipeline_mode = #tpu.pipeline_mode<synchronous>, transform_indices = @transform_6, window_bounds = array<i64: 32, 32>}, {pipeline_mode = #tpu.pipeline_mode<synchronous>, transform_indices = @transform_7, window_bounds = array<i64: 1, 32>}, {pipeline_mode = #tpu.pipeline_mode<synchronous>, transform_indices = @transform_8, window_bounds = array<i64: 32, 32>}, {pipeline_mode = #tpu.pipeline_mode<synchronous>, transform_indices = @transform_9, window_bounds = array<i64: 1, 32>}, {pipeline_mode = #tpu.pipeline_mode<synchronous>, transform_indices = @transform_10, window_bounds = array<i64: 32, 128>}, {pipeline_mode = #tpu.pipeline_mode<synchronous>, transform_indices = @transform_11, window_bounds = array<i64: 32, 128>}, {pipeline_mode = #tpu.pipeline_mode<synchronous>, transform_indices = @transform_12, window_bounds = array<i64: 1, 128>}, {pipeline_mode = #tpu.pipeline_mode<synchronous>, transform_indices = @transform_13, window_bounds = array<i64: 1, 128>}, {pipeline_mode = #tpu.pipeline_mode<synchronous>, transform_indices = @transform_14, window_bounds = array<i64: 1, 128>}, {pipeline_mode = #tpu.pipeline_mode<synchronous>, transform_indices = @transform_15, window_bounds = array<i64: 2, 128>}]} {
    %c0_i32 = arith.constant 0 : i32
    %0 = arith.cmpi eq, %arg0, %c0_i32 : i32
    %1 = arith.extui %0 : i1 to i32
    %c0_i32_0 = arith.constant 0 : i32
    %2 = arith.cmpi ne, %1, %c0_i32_0 : i32
    scf.if %2 {
      %cst_10 = arith.constant 0.000000e+00 : f32
      %12 = vector.broadcast %cst_10 : f32 to vector<2x32xf32>
      %c0_11 = arith.constant 0 : index
      %c0_12 = arith.constant 0 : index
      %13 = vector.load %arg17[%c0_11, %c0_12] : memref<2x32xf32, #tpu.memory_space<vmem>>, vector<2x32xf32>
      tpu.vector_store %arg17[%c0_11, %c0_12], %12 {strides = array<i32>} : memref<2x32xf32, #tpu.memory_space<vmem>>, vector<2x32xf32>,
    } else {
    }
    %c0 = arith.constant 0 : index
    %c0_1 = arith.constant 0 : index
    %3 = vector.load %arg17[%c0, %c0_1] : memref<2x32xf32, #tpu.memory_space<vmem>>, vector<2x32xf32>
    %c0_2 = arith.constant 0 : index
    %c0_3 = arith.constant 0 : index
    %4 = vector.load %arg1[%c0_2, %c0_3] : memref<2x128xbf16, #tpu.memory_space<vmem>>, vector<2x128xbf16>
    %c0_4 = arith.constant 0 : index
    %c0_5 = arith.constant 0 : index
    %5 = vector.load %arg2[%c0_4, %c0_5] : memref<128x32xbf16, #tpu.memory_space<vmem>>, vector<128x32xbf16>
    %cst = arith.constant dense<0.000000e+00> : vector<2x32xf32>
    %6 = tpu.matmul %4, %5, %cst {dimension_numbers = #tpu.dot_dimension_numbers<[1], [0], [0], [1], [0, 0, 1, 1], [], []>} : vector<2x128xbf16>, vector<128x32xbf16>, vector<2x32xf32> -> vector<2x32xf32>
    %7 = arith.addf %3, %6 : vector<2x32xf32>
    %c0_6 = arith.constant 0 : index
    %c0_7 = arith.constant 0 : index
    %8 = vector.load %arg17[%c0_6, %c0_7] : memref<2x32xf32, #tpu.memory_space<vmem>>, vector<2x32xf32>
    tpu.vector_store %arg17[%c0_6, %c0_7], %7 {strides = array<i32>} : memref<2x32xf32, #tpu.memory_space<vmem>>, vector<2x32xf32>,
    %c0_i32_8 = arith.constant 0 : i32
    %9 = arith.cmpi eq, %arg0, %c0_i32_8 : i32
    %10 = arith.extui %9 : i1 to i32
    %c0_i32_9 = arith.constant 0 : i32
    %11 = arith.cmpi ne, %10, %c0_i32_9 : i32
    scf.if %11 {
      %c0_10 = arith.constant 0 : index
      %c0_11 = arith.constant 0 : index
      %12 = vector.load %arg17[%c0_10, %c0_11] : memref<2x32xf32, #tpu.memory_space<vmem>>, vector<2x32xf32>
      %c0_12 = arith.constant 0 : index
      %c0_13 = arith.constant 0 : index
      %13 = vector.load %arg3[%c0_12, %c0_13] : memref<1x32xf32, #tpu.memory_space<vmem>>, vector<1x32xf32>
      %14 = vector.broadcast %13 : vector<1x32xf32> to vector<2x32xf32>
      %15 = arith.addf %12, %14 : vector<2x32xf32>
      %16 = arith.truncf %15 : vector<2x32xf32> to vector<2x32xbf16>
      %c0_14 = arith.constant 0 : index
      %c0_15 = arith.constant 0 : index
      %17 = vector.load %arg7[%c0_14, %c0_15] : memref<32x32xbf16, #tpu.memory_space<vmem>>, vector<32x32xbf16>
      %cst_16 = arith.constant dense<0.000000e+00> : vector<2x32xf32>
      %18 = tpu.matmul %16, %17, %cst_16 {dimension_numbers = #tpu.dot_dimension_numbers<[1], [0], [0], [1], [0, 0, 1, 1], [], []>} : vector<2x32xbf16>, vector<32x32xbf16>, vector<2x32xf32> -> vector<2x32xf32>
      %c0_17 = arith.constant 0 : index
      %c0_18 = arith.constant 0 : index
      %19 = vector.load %arg8[%c0_17, %c0_18] : memref<1x32xf32, #tpu.memory_space<vmem>>, vector<1x32xf32>
      %20 = vector.broadcast %19 : vector<1x32xf32> to vector<2x32xf32>
      %21 = arith.addf %18, %20 : vector<2x32xf32>
      %cst_19 = arith.constant 5.000000e-01 : f32
      %22 = vector.broadcast %cst_19 : f32 to vector<2x32xf32>
      %23 = arith.mulf %22, %21 : vector<2x32xf32>
      %cst_20 = arith.constant 0.707106769 : f32
      %24 = vector.broadcast %cst_20 : f32 to vector<2x32xf32>
      %25 = arith.mulf %21, %24 : vector<2x32xf32>
      %26 = math.erf %25 : vector<2x32xf32>
      %cst_21 = arith.constant 1.000000e+00 : f32
      %27 = vector.broadcast %cst_21 : f32 to vector<2x32xf32>
      %28 = arith.addf %27, %26 : vector<2x32xf32>
      %29 = arith.mulf %23, %28 : vector<2x32xf32>
      %30 = arith.truncf %29 : vector<2x32xf32> to vector<2x32xbf16>
      %c0_22 = arith.constant 0 : index
      %c0_23 = arith.constant 0 : index
      %31 = vector.load %arg9[%c0_22, %c0_23] : memref<32x32xbf16, #tpu.memory_space<vmem>>, vector<32x32xbf16>
      %cst_24 = arith.constant dense<0.000000e+00> : vector<2x32xf32>
      %32 = tpu.matmul %30, %31, %cst_24 {dimension_numbers = #tpu.dot_dimension_numbers<[1], [0], [0], [1], [0, 0, 1, 1], [], []>} : vector<2x32xbf16>, vector<32x32xbf16>, vector<2x32xf32> -> vector<2x32xf32>
      %c0_25 = arith.constant 0 : index
      %c0_26 = arith.constant 0 : index
      %33 = vector.load %arg10[%c0_25, %c0_26] : memref<1x32xf32, #tpu.memory_space<vmem>>, vector<1x32xf32>
      %34 = vector.broadcast %33 : vector<1x32xf32> to vector<2x32xf32>
      %35 = arith.addf %32, %34 : vector<2x32xf32>
      %c0_27 = arith.constant 0 : index
      %c0_28 = arith.constant 0 : index
      %c0_29 = arith.constant 0 : index
      %36 = vector.load %arg4[%c0_27, %c0_28, %c0_29] : memref<2x4x256xbf16, #tpu.memory_space<vmem>>, vector<2x4x256xbf16>
      %37 = tpu.iota {dimensions = array<i32: 1>} : vector<32x128xi32>
      %cst_30 = arith.constant 0.000000e+00 : f32
      %38 = vector.broadcast %cst_30 : f32 to vector<32x128xf32>
      %c0_31 = arith.constant 0 : index
      %c0_32 = arith.constant 0 : index
      %39 = vector.load %arg5[%c0_31, %c0_32] : memref<32x4xbf16, #tpu.memory_space<vmem>>, vector<32x4xbf16>
      %40 = vector.extract_strided_slice %36 {offsets = [0, 0, 0], sizes = [1, 4, 256], strides = [1, 1, 1]} : vector<2x4x256xbf16> to vector<1x4x256xbf16>
      %41 = vector.shape_cast %40 : vector<1x4x256xbf16> to vector<4x256xbf16>
      %cst_33 = arith.constant dense<0.000000e+00> : vector<32x256xf32>
      %42 = tpu.matmul %39, %41, %cst_33 {dimension_numbers = #tpu.dot_dimension_numbers<[1], [0], [0], [1], [0, 0, 1, 1], [], []>} : vector<32x4xbf16>, vector<4x256xbf16>, vector<32x256xf32> -> vector<32x256xf32>
      %c0_34 = arith.constant 0 : index
      %c0_35 = arith.constant 0 : index
      %43 = vector.load %arg6[%c0_34, %c0_35] : memref<32x1xf32, #tpu.memory_space<vmem>>, vector<32x1xf32>
      %44 = vector.broadcast %43 : vector<32x1xf32> to vector<32x256xf32>
      %45 = arith.addf %42, %44 : vector<32x256xf32>
      %cst_36 = arith.constant 0.000000e+00 : f32
      %46 = vector.broadcast %cst_36 : f32 to vector<32x256xf32>
      %47 = arith.maximumf %45, %46 : vector<32x256xf32>
      %cst_37 = arith.constant dense<0.000000e+00> : vector<32xf32>
      %48 = vector.multi_reduction <add>, %47, %cst_37 [1] : vector<32x256xf32> to vector<32xf32>
      %49 = vector.shape_cast %48 : vector<32xf32> to vector<32x1xf32>
      %cst_38 = arith.constant 2.560000e+02 : f32
      %50 = vector.broadcast %cst_38 : f32 to vector<32x1xf32>
      %51 = arith.divf %49, %50 : vector<32x1xf32>
      %c0_i32_39 = arith.constant 0 : i32
      %52 = vector.broadcast %c0_i32_39 : i32 to vector<32x128xi32>
      %53 = arith.cmpi eq, %37, %52 : vector<32x128xi32>
      %cst_40 = arith.constant 0.000000e+00 : f32
      %54 = vector.shape_cast %51 : vector<32x1xf32> to vector<32x1xf32>
      %55 = vector.broadcast %54 : vector<32x1xf32> to vector<32x128xf32>
      %56 = vector.broadcast %cst_40 : f32 to vector<32x128xf32>
      %57 = arith.select %53, %55, %56 : vector<32x128xi1>, vector<32x128xf32>
      %58 = arith.addf %38, %57 : vector<32x128xf32>
      %c0_41 = arith.constant 0 : index
      %c0_42 = arith.constant 0 : index
      %59 = vector.load %arg5[%c0_41, %c0_42] : memref<32x4xbf16, #tpu.memory_space<vmem>>, vector<32x4xbf16>
      %60 = vector.extract_strided_slice %36 {offsets = [1, 0, 0], sizes = [1, 4, 256], strides = [1, 1, 1]} : vector<2x4x256xbf16> to vector<1x4x256xbf16>
      %61 = vector.shape_cast %60 : vector<1x4x256xbf16> to vector<4x256xbf16>
      %cst_43 = arith.constant dense<0.000000e+00> : vector<32x256xf32>
      %62 = tpu.matmul %59, %61, %cst_43 {dimension_numbers = #tpu.dot_dimension_numbers<[1], [0], [0], [1], [0, 0, 1, 1], [], []>} : vector<32x4xbf16>, vector<4x256xbf16>, vector<32x256xf32> -> vector<32x256xf32>
      %c0_44 = arith.constant 0 : index
      %c0_45 = arith.constant 0 : index
      %63 = vector.load %arg6[%c0_44, %c0_45] : memref<32x1xf32, #tpu.memory_space<vmem>>, vector<32x1xf32>
      %64 = vector.broadcast %63 : vector<32x1xf32> to vector<32x256xf32>
      %65 = arith.addf %62, %64 : vector<32x256xf32>
      %cst_46 = arith.constant 0.000000e+00 : f32
      %66 = vector.broadcast %cst_46 : f32 to vector<32x256xf32>
      %67 = arith.maximumf %65, %66 : vector<32x256xf32>
      %cst_47 = arith.constant dense<0.000000e+00> : vector<32xf32>
      %68 = vector.multi_reduction <add>, %67, %cst_47 [1] : vector<32x256xf32> to vector<32xf32>
      %69 = vector.shape_cast %68 : vector<32xf32> to vector<32x1xf32>
      %cst_48 = arith.constant 2.560000e+02 : f32
      %70 = vector.broadcast %cst_48 : f32 to vector<32x1xf32>
      %71 = arith.divf %69, %70 : vector<32x1xf32>
      %c1_i32 = arith.constant 1 : i32
      %72 = vector.broadcast %c1_i32 : i32 to vector<32x128xi32>
      %73 = arith.cmpi eq, %37, %72 : vector<32x128xi32>
      %cst_49 = arith.constant 0.000000e+00 : f32
      %74 = vector.shape_cast %71 : vector<32x1xf32> to vector<32x1xf32>
      %75 = vector.broadcast %74 : vector<32x1xf32> to vector<32x128xf32>
      %76 = vector.broadcast %cst_49 : f32 to vector<32x128xf32>
      %77 = arith.select %73, %75, %76 : vector<32x128xi1>, vector<32x128xf32>
      %78 = arith.addf %58, %77 : vector<32x128xf32>
      %79 = tpu.transpose %78, [1, 0] : vector<32x128xf32> -> vector<128x32xf32>
      %80 = vector.extract_strided_slice %79 {offsets = [0, 0], sizes = [2, 32], strides = [1, 1]} : vector<128x32xf32> to vector<2x32xf32>
      %81 = arith.truncf %35 : vector<2x32xf32> to vector<2x32xbf16>
      %c0_50 = arith.constant 0 : index
      %c0_51 = arith.constant 0 : index
      %82 = vector.load %arg11[%c0_50, %c0_51] : memref<32x128xbf16, #tpu.memory_space<vmem>>, vector<32x128xbf16>
      %cst_52 = arith.constant dense<0.000000e+00> : vector<2x128xf32>
      %83 = tpu.matmul %81, %82, %cst_52 {dimension_numbers = #tpu.dot_dimension_numbers<[1], [0], [0], [1], [0, 0, 1, 1], [], []>} : vector<2x32xbf16>, vector<32x128xbf16>, vector<2x128xf32> -> vector<2x128xf32>
      %84 = arith.truncf %80 : vector<2x32xf32> to vector<2x32xbf16>
      %c0_53 = arith.constant 0 : index
      %c0_54 = arith.constant 0 : index
      %85 = vector.load %arg12[%c0_53, %c0_54] : memref<32x128xbf16, #tpu.memory_space<vmem>>, vector<32x128xbf16>
      %cst_55 = arith.constant dense<0.000000e+00> : vector<2x128xf32>
      %86 = tpu.matmul %84, %85, %cst_55 {dimension_numbers = #tpu.dot_dimension_numbers<[1], [0], [0], [1], [0, 0, 1, 1], [], []>} : vector<2x32xbf16>, vector<32x128xbf16>, vector<2x128xf32> -> vector<2x128xf32>
      %87 = arith.addf %83, %86 : vector<2x128xf32>
      %c0_56 = arith.constant 0 : index
      %c0_57 = arith.constant 0 : index
      %88 = vector.load %arg13[%c0_56, %c0_57] : memref<1x128xf32, #tpu.memory_space<vmem>>, vector<1x128xf32>
      %89 = vector.broadcast %88 : vector<1x128xf32> to vector<2x128xf32>
      %90 = arith.addf %87, %89 : vector<2x128xf32>
      %cst_58 = arith.constant dense<0.000000e+00> : vector<2xf32>
      %91 = vector.multi_reduction <add>, %90, %cst_58 [1] : vector<2x128xf32> to vector<2xf32>
      %92 = vector.shape_cast %91 : vector<2xf32> to vector<2x1xf32>
      %cst_59 = arith.constant 1.280000e+02 : f32
      %93 = vector.broadcast %cst_59 : f32 to vector<2x1xf32>
      %94 = arith.divf %92, %93 : vector<2x1xf32>
      %95 = vector.broadcast %94 : vector<2x1xf32> to vector<2x128xf32>
      %96 = arith.subf %90, %95 : vector<2x128xf32>
      %97 = arith.mulf %96, %96 : vector<2x128xf32>
      %cst_60 = arith.constant dense<0.000000e+00> : vector<2xf32>
      %98 = vector.multi_reduction <add>, %97, %cst_60 [1] : vector<2x128xf32> to vector<2xf32>
      %99 = vector.shape_cast %98 : vector<2xf32> to vector<2x1xf32>
      %cst_61 = arith.constant 1.280000e+02 : f32
      %100 = vector.broadcast %cst_61 : f32 to vector<2x1xf32>
      %101 = arith.divf %99, %100 : vector<2x1xf32>
      %102 = vector.broadcast %94 : vector<2x1xf32> to vector<2x128xf32>
      %103 = arith.subf %90, %102 : vector<2x128xf32>
      %cst_62 = arith.constant 9.99999974E-6 : f32
      %104 = vector.broadcast %cst_62 : f32 to vector<2x1xf32>
      %105 = arith.addf %101, %104 : vector<2x1xf32>
      %106 = math.rsqrt %105 : vector<2x1xf32>
      %107 = vector.broadcast %106 : vector<2x1xf32> to vector<2x128xf32>
      %108 = arith.mulf %103, %107 : vector<2x128xf32>
      %c0_63 = arith.constant 0 : index
      %c0_64 = arith.constant 0 : index
      %109 = vector.load %arg14[%c0_63, %c0_64] : memref<1x128xf32, #tpu.memory_space<vmem>>, vector<1x128xf32>
      %110 = vector.broadcast %109 : vector<1x128xf32> to vector<2x128xf32>
      %111 = arith.mulf %108, %110 : vector<2x128xf32>
      %c0_65 = arith.constant 0 : index
      %c0_66 = arith.constant 0 : index
      %112 = vector.load %arg15[%c0_65, %c0_66] : memref<1x128xf32, #tpu.memory_space<vmem>>, vector<1x128xf32>
      %113 = vector.broadcast %112 : vector<1x128xf32> to vector<2x128xf32>
      %114 = arith.addf %111, %113 : vector<2x128xf32>
      %cst_67 = arith.constant 0.000000e+00 : f32
      %115 = vector.broadcast %cst_67 : f32 to vector<2x128xf32>
      %116 = arith.maximumf %114, %115 : vector<2x128xf32>
      %c0_68 = arith.constant 0 : index
      %c0_69 = arith.constant 0 : index
      %117 = vector.load %arg16[%c0_68, %c0_69] : memref<2x128xf32, #tpu.memory_space<vmem>>, vector<2x128xf32>
      tpu.vector_store %arg16[%c0_68, %c0_69], %116 {strides = array<i32>} : memref<2x128xf32, #tpu.memory_space<vmem>>, vector<2x128xf32>,
    } else {
    }
    return
  }
  func.func @transform_0(%arg0: i32) -> (i32, i32) {
    %c0_i32 = arith.constant 0 : i32
    %c0_i32_0 = arith.constant 0 : i32
    return %c0_i32, %arg0 : i32, i32
  }
  func.func @transform_1(%arg0: i32) -> (i32, i32) {
    %c0_i32 = arith.constant 0 : i32
    %c0_i32_0 = arith.constant 0 : i32
    return %arg0, %c0_i32 : i32, i32
  }
  func.func @transform_2(%arg0: i32) -> (i32, i32) {
    %c0_i32 = arith.constant 0 : i32
    %c0_i32_0 = arith.constant 0 : i32
    %c0_i32_1 = arith.constant 0 : i32
    return %c0_i32, %c0_i32_0 : i32, i32
  }
  func.func @transform_3(%arg0: i32) -> (i32, i32, i32) {
    %c0_i32 = arith.constant 0 : i32
    %c0_i32_0 = arith.constant 0 : i32
    %c0_i32_1 = arith.constant 0 : i32
    %c0_i32_2 = arith.constant 0 : i32
    return %c0_i32, %c0_i32_0, %c0_i32_1 : i32, i32, i32
  }
  func.func @transform_4(%arg0: i32) -> (i32, i32) {
    %c0_i32 = arith.constant 0 : i32
    %c0_i32_0 = arith.constant 0 : i32
    %c0_i32_1 = arith.constant 0 : i32
    return %c0_i32, %c0_i32_0 : i32, i32
  }
  func.func @transform_5(%arg0: i32) -> (i32, i32) {
    %c0_i32 = arith.constant 0 : i32
    %c0_i32_0 = arith.constant 0 : i32
    %c0_i32_1 = arith.constant 0 : i32
    return %c0_i32, %c0_i32_0 : i32, i32
  }
  func.func @transform_6(%arg0: i32) -> (i32, i32) {
    %c0_i32 = arith.constant 0 : i32
    %c0_i32_0 = arith.constant 0 : i32
    %c0_i32_1 = arith.constant 0 : i32
    return %c0_i32, %c0_i32_0 : i32, i32
  }
  func.func @transform_7(%arg0: i32) -> (i32, i32) {
    %c0_i32 = arith.constant 0 : i32
    %c0_i32_0 = arith.constant 0 : i32
    %c0_i32_1 = arith.constant 0 : i32
    return %c0_i32, %c0_i32_0 : i32, i32
  }
  func.func @transform_8(%arg0: i32) -> (i32, i32) {
    %c0_i32 = arith.constant 0 : i32
    %c0_i32_0 = arith.constant 0 : i32
    %c0_i32_1 = arith.constant 0 : i32
    return %c0_i32, %c0_i32_0 : i32, i32
  }
  func.func @transform_9(%arg0: i32) -> (i32, i32) {
    %c0_i32 = arith.constant 0 : i32
    %c0_i32_0 = arith.constant 0 : i32
    %c0_i32_1 = arith.constant 0 : i32
    return %c0_i32, %c0_i32_0 : i32, i32
  }
  func.func @transform_10(%arg0: i32) -> (i32, i32) {
    %c0_i32 = arith.constant 0 : i32
    %c0_i32_0 = arith.constant 0 : i32
    %c0_i32_1 = arith.constant 0 : i32
    return %c0_i32, %c0_i32_0 : i32, i32
  }
  func.func @transform_11(%arg0: i32) -> (i32, i32) {
    %c0_i32 = arith.constant 0 : i32
    %c0_i32_0 = arith.constant 0 : i32
    %c0_i32_1 = arith.constant 0 : i32
    return %c0_i32, %c0_i32_0 : i32, i32
  }
  func.func @transform_12(%arg0: i32) -> (i32, i32) {
    %c0_i32 = arith.constant 0 : i32
    %c0_i32_0 = arith.constant 0 : i32
    %c0_i32_1 = arith.constant 0 : i32
    return %c0_i32, %c0_i32_0 : i32, i32
  }
  func.func @transform_13(%arg0: i32) -> (i32, i32) {
    %c0_i32 = arith.constant 0 : i32
    %c0_i32_0 = arith.constant 0 : i32
    %c0_i32_1 = arith.constant 0 : i32
    return %c0_i32, %c0_i32_0 : i32, i32
  }
  func.func @transform_14(%arg0: i32) -> (i32, i32) {
    %c0_i32 = arith.constant 0 : i32
    %c0_i32_0 = arith.constant 0 : i32
    %c0_i32_1 = arith.constant 0 : i32
    return %c0_i32, %c0_i32_0 : i32, i32
  }
  func.func @transform_15(%arg0: i32) -> (i32, i32) {
    %c0_i32 = arith.constant 0 : i32
    %c0_i32_0 = arith.constant 0 : i32
    %c0_i32_1 = arith.constant 0 : i32
    return %c0_i32, %c0_i32_0 : i32, i32
  }
}

</mosaic_0001>

<llo_original>
// kernel: concat_model_forward.3
$region0: #{concat_model_forward.3}
  #allocation0 [shape = 'u32[]', space=smem, size = 0x4, offset = 0x4, fixed_abs, tag = 'smem constant byte address 0x4 - core index']
  #allocation1 [shape = 'u32[144,128]{1,0:T(1,128)}', space=vmem, size = 0x12000, scoped, tag = 'internal scratch']
  %s0 = inlined_call_operand.vmem [shape: f32[2,128], index: 0, kind: input, shape index: {}]
  %s1 = inlined_call_operand.vmem [shape: bf16[128,128], index: 1, kind: input, shape index: {}]
  %s2 = inlined_call_operand.vmem [shape: f32[1,128], index: 2, kind: input, shape index: {}]
  %s3 = inlined_call_operand.hbm [shape: f32[2,128], index: 3, kind: output, shape index: {}]
  %s4 = sld [smem:[#allocation0]]
  $region22: #{concat_model_forward.3} parent=0
    _
  %s6 = ssub.s32 1, %s4
  %s7 = scalar_select 0, %s6, %s4
  $region1: #{concat_model_forward.3} parent=0
    #allocation2 [shape = 'u8[1024]{0}', space=vmem, size = 0x400, scoped, tag = 'output window, operand 0, single buffered']
    #allocation3 [shape = 's32[1]{0}', space=sflag, size = 0x4, scoped, tag = 'scoped memory for concat_model_forward.3']
    %8 = vsyncpa [#allocation3], 0
    // Predicated region
    $region2: #{concat_model_forward.3} parent=1 // pred_check
      _
    $region3: #{concat_model_forward.3} parent=1 // pred_check_branch
      %10 = sbr.rel (0) target = $region5
    $region4: #{concat_model_forward.3} parent=1 // pred_region
      _
    $region5: #{concat_model_forward.3} parent=1 // pred_fallthru
      _
    // Predicated region
    $region6: #{concat_model_forward.3} parent=1 // pred_check
      _
    $region7: #{concat_model_forward.3} parent=1 // pred_check_branch
      %12 = sbr.rel (0) target = $region9
    $region8: #{concat_model_forward.3} parent=1 // pred_region
      _
    $region9: #{concat_model_forward.3} parent=1 // pred_fallthru
      _
    // Predicated region
    $region10: #{concat_model_forward.3} parent=1 // pred_check
      _
    $region11: #{concat_model_forward.3} parent=1 // pred_check_branch
      %14 = sbr.rel (0) target = $region13
    $region12: #{concat_model_forward.3} parent=1 // pred_region
      _
    $region13: #{concat_model_forward.3} parent=1 // pred_fallthru
      _
    %v16 = vld [vmem:[%s0] sm:$0x3]
    %v17 = vpack.c.bf16 %v16, %v16
    %v18 = vld [vmem:[%s1] sm:$0xf]
    %v19 = vld [vmem:[%s1 + $0x4] sm:$0xf]
    %v20 = vld [vmem:[%s1 + $0x8] sm:$0xf]
    %v21 = vld [vmem:[%s1 + $0xc] sm:$0xf]
    %v22 = vld [vmem:[%s1 + $0x10] sm:$0xf]
    %v23 = vld [vmem:[%s1 + $0x14] sm:$0xf]
    %v24 = vld [vmem:[%s1 + $0x18] sm:$0xf]
    %v25 = vld [vmem:[%s1 + $0x1c] sm:$0xf]
    %v26 = vld [vmem:[%s1 + $0x20] sm:$0xf]
    %v27 = vld [vmem:[%s1 + $0x24] sm:$0xf]
    %v28 = vld [vmem:[%s1 + $0x28] sm:$0xf]
    %v29 = vld [vmem:[%s1 + $0x2c] sm:$0xf]
    %v30 = vld [vmem:[%s1 + $0x30] sm:$0xf]
    %v31 = vld [vmem:[%s1 + $0x34] sm:$0xf]
    %v32 = vld [vmem:[%s1 + $0x38] sm:$0xf]
    %v33 = vld [vmem:[%s1 + $0x3c] sm:$0xf]
    %v34 = vld [vmem:[%s2] sm:$0x1]
    %v36 = vlaneseq
    %v37 = vshrl.u32 %v36, 7
    %v38 = vsub.s32 0, %v37
    %v39 = vrot.slane %v34, %v38
    %v57 = vunpack.c.l.b16 %v18
    %v58 = vunpack.c.l.b16 %v19
    %v59 = vunpack.c.l.b16 %v20
    %v60 = vunpack.c.l.b16 %v21
    %v61 = vunpack.c.l.b16 %v22
    %v62 = vunpack.c.l.b16 %v23
    %v63 = vunpack.c.l.b16 %v24
    %v64 = vunpack.c.l.b16 %v25
    %v65 = vunpack.c.l.b16 %v26
    %v66 = vunpack.c.l.b16 %v27
    %v67 = vunpack.c.l.b16 %v28
    %v68 = vunpack.c.l.b16 %v29
    %v69 = vunpack.c.l.b16 %v30
    %v70 = vunpack.c.l.b16 %v31
    %v71 = vunpack.c.l.b16 %v32
    %v72 = vunpack.c.l.b16 %v33
    %v73 = vpack.c.b16 %v58, %v57
    %v74 = vpack.c.b16 %v60, %v59
    %v75 = vpack.c.b16 %v62, %v61
    %v76 = vpack.c.b16 %v64, %v63
    %v77 = vpack.c.b16 %v66, %v65
    %v78 = vpack.c.b16 %v68, %v67
    %v79 = vpack.c.b16 %v70, %v69
    %v80 = vpack.c.b16 %v72, %v71
    %89 = vmatprep.subr.bf16.mxu0 0
    %90 = vmatpush1.bf16.msra.mxu0 %v73
    %91 = vmatprep.subr.bf16.mxu0 0
    %92 = vmatpush1.bf16.msra.mxu0 %v74
    %93 = vmatprep.subr.bf16.mxu0 0
    %94 = vmatpush1.bf16.msra.mxu0 %v75
    %95 = vmatprep.subr.bf16.mxu0 0
    %96 = vmatpush1.bf16.msra.mxu0 %v76
    %97 = vmatprep.subr.bf16.mxu0 0
    %98 = vmatpush1.bf16.msra.mxu0 %v77
    %99 = vmatprep.subr.bf16.mxu0 0
    %100 = vmatpush1.bf16.msra.mxu0 %v78
    %101 = vmatprep.subr.bf16.mxu0 0
    %102 = vmatpush1.bf16.msra.mxu0 %v79
    %103 = vmatprep.subr.bf16.mxu0 0
    %104 = vmatpush1.bf16.msra.mxu0 %v80
    %105 = vmatprep.subr.bf16.mxu0 0
    %106 = vmatpush1.bf16.msra.mxu0 0
    %107 = vmatprep.subr.bf16.mxu0 0
    %108 = vmatpush1.bf16.msra.mxu0 0
    %109 = vmatprep.subr.bf16.mxu0 0
    %110 = vmatpush1.bf16.msra.mxu0 0
    %111 = vmatprep.subr.bf16.mxu0 0
    %112 = vmatpush1.bf16.msra.mxu0 0
    %113 = vmatprep.subr.bf16.mxu0 0
    %114 = vmatpush1.bf16.msra.mxu0 0
    %115 = vmatprep.subr.bf16.mxu0 0
    %116 = vmatpush1.bf16.msra.mxu0 0
    %117 = vmatprep.subr.bf16.mxu0 0
    %118 = vmatpush1.bf16.msra.mxu0 0
    %119 = vmatprep.subr.bf16.mxu0 0
    %120 = vmatpush1.bf16.msra.mxu0 0
    %121 = vmatprep.mubr.bf16.mxu0 0
    %122 = vmatmul.mubr.bf16.gmra.mrb[0].mxu0 %v17
    %v123 = vpop.f32.mrb[0].mxu0
    %v124 = vadd.f32 %v39, %v123
    %v125 = vpop.f32.mrb[0].mxu0
    %v126 = vpop.f32.mrb[0].mxu0
    %v127 = vpop.f32.mrb[0].mxu0
    %128 = vdwg.mxu0
    %129 = vst [vmem:[#allocation2] sm:$0x3] %v124
    // Predicated region
    $region14: #{concat_model_forward.3} parent=1 // pred_check
      _
    $region15: #{concat_model_forward.3} parent=1 // pred_check_branch
      %131 = sbr.rel (0) target = $region17
    $region16: #{concat_model_forward.3} parent=1 // pred_region
      %s133 = ssub.s32 32, 32
      %134 = vsyncadd [#allocation3], %s133
      %s136 = sshll.u32 [#allocation2], 4
      %s137 = int_to_ptr.vmem [resolvable:$true] %s136
      %139 = dma.vmem_to_hbm [thread:$0]  %s137, 32, %s3, [#allocation3]
    $region17: #{concat_model_forward.3} parent=1 // pred_fallthru
      _
    // Predicated region
    $region18: #{concat_model_forward.3} parent=1 // pred_check
      _
    $region19: #{concat_model_forward.3} parent=1 // pred_check_branch
      %141 = sbr.rel (0) target = $region21
    $region20: #{concat_model_forward.3} parent=1 // pred_region
      %142 = dma.done [#allocation3], 32
    $region21: #{concat_model_forward.3} parent=1 // pred_fallthru
      _
    %143 = vsyncpa [#allocation3], 1

// kernel: concat_model_forward.2
$region0: #{concat_model_forward.2}
  #allocation0 [shape = 'u32[]', space=smem, size = 0x4, offset = 0x4, fixed_abs, tag = 'smem constant byte address 0x4 - core index']
  #allocation1 [shape = 'u32[144,128]{1,0:T(1,128)}', space=vmem, size = 0x12000, scoped, tag = 'internal scratch']
  #allocation2 [shape = 'f32[2,32]{1,0:T(2,128)}', space=vmem, size = 0x400, scoped, tag = 'scratch operand']
  %s0 = inlined_call_operand.vmem [shape: bf16[2,128], index: 0, kind: input, shape index: {}]
  %s1 = inlined_call_operand.vmem [shape: bf16[128,32], index: 1, kind: input, shape index: {}]
  %s2 = inlined_call_operand.vmem [shape: f32[1,32], index: 2, kind: input, shape index: {}]
  %s3 = inlined_call_operand.vmem [shape: bf16[2,4,256], index: 3, kind: input, shape index: {}]
  %s4 = inlined_call_operand.vmem [shape: bf16[32,4], index: 4, kind: input, shape index: {}]
  %s5 = inlined_call_operand.vmem [shape: f32[32,1], index: 5, kind: input, shape index: {}]
  %s6 = inlined_call_operand.vmem [shape: bf16[32,32], index: 6, kind: input, shape index: {}]
  %s7 = inlined_call_operand.vmem [shape: f32[1,32], index: 7, kind: input, shape index: {}]
  %s8 = inlined_call_operand.vmem [shape: bf16[32,32], index: 8, kind: input, shape index: {}]
  %s9 = inlined_call_operand.vmem [shape: f32[1,32], index: 9, kind: input, shape index: {}]
  %s10 = inlined_call_operand.vmem [shape: bf16[32,128], index: 10, kind: input, shape index: {}]
  %s11 = inlined_call_operand.vmem [shape: bf16[32,128], index: 11, kind: input, shape index: {}]
  %s12 = inlined_call_operand.vmem [shape: f32[1,128], index: 12, kind: input, shape index: {}]
  %s13 = inlined_call_operand.vmem [shape: f32[1,128], index: 13, kind: input, shape index: {}]
  %s14 = inlined_call_operand.vmem [shape: f32[1,128], index: 14, kind: input, shape index: {}]
  %s15 = inlined_call_operand.vmem [shape: f32[2,128], index: 15, kind: output, shape index: {}]
  %s16 = sld [smem:[#allocation0]]
  $region78: #{concat_model_forward.2} parent=0
    _
  %s18 = ssub.s32 1, %s16
  %s19 = scalar_select 0, %s18, %s16
  // Predicated region
  $region2: #{concat_model_forward.2} parent=0 // pred_check
    _
  $region3: #{concat_model_forward.2} parent=0 // pred_check_branch
    %21 = sbr.rel (0) target = $region5
  $region4: #{concat_model_forward.2} parent=0 // pred_region
    _
  $region5: #{concat_model_forward.2} parent=0 // pred_fallthru
    _
  // Predicated region
  $region6: #{concat_model_forward.2} parent=0 // pred_check
    _
  $region7: #{concat_model_forward.2} parent=0 // pred_check_branch
    %23 = sbr.rel (0) target = $region9
  $region8: #{concat_model_forward.2} parent=0 // pred_region
    _
  $region9: #{concat_model_forward.2} parent=0 // pred_fallthru
    _
  // Predicated region
  $region10: #{concat_model_forward.2} parent=0 // pred_check
    _
  $region11: #{concat_model_forward.2} parent=0 // pred_check_branch
    %25 = sbr.rel (0) target = $region13
  $region12: #{concat_model_forward.2} parent=0 // pred_region
    _
  $region13: #{concat_model_forward.2} parent=0 // pred_fallthru
    _
  // Predicated region
  $region14: #{concat_model_forward.2} parent=0 // pred_check
    _
  $region15: #{concat_model_forward.2} parent=0 // pred_check_branch
    %27 = sbr.rel (0) target = $region17
  $region16: #{concat_model_forward.2} parent=0 // pred_region
    _
  $region17: #{concat_model_forward.2} parent=0 // pred_fallthru
    _
  // Predicated region
  $region18: #{concat_model_forward.2} parent=0 // pred_check
    _
  $region19: #{concat_model_forward.2} parent=0 // pred_check_branch
    %29 = sbr.rel (0) target = $region21
  $region20: #{concat_model_forward.2} parent=0 // pred_region
    _
  $region21: #{concat_model_forward.2} parent=0 // pred_fallthru
    _
  // Predicated region
  $region22: #{concat_model_forward.2} parent=0 // pred_check
    _
  $region23: #{concat_model_forward.2} parent=0 // pred_check_branch
    %31 = sbr.rel (0) target = $region25
  $region24: #{concat_model_forward.2} parent=0 // pred_region
    _
  $region25: #{concat_model_forward.2} parent=0 // pred_fallthru
    _
  // Predicated region
  $region26: #{concat_model_forward.2} parent=0 // pred_check
    _
  $region27: #{concat_model_forward.2} parent=0 // pred_check_branch
    %33 = sbr.rel (0) target = $region29
  $region28: #{concat_model_forward.2} parent=0 // pred_region
    _
  $region29: #{concat_model_forward.2} parent=0 // pred_fallthru
    _
  // Predicated region
  $region30: #{concat_model_forward.2} parent=0 // pred_check
    _
  $region31: #{concat_model_forward.2} parent=0 // pred_check_branch
    %35 = sbr.rel (0) target = $region33
  $region32: #{concat_model_forward.2} parent=0 // pred_region
    _
  $region33: #{concat_model_forward.2} parent=0 // pred_fallthru
    _
  // Predicated region
  $region34: #{concat_model_forward.2} parent=0 // pred_check
    _
  $region35: #{concat_model_forward.2} parent=0 // pred_check_branch
    %37 = sbr.rel (0) target = $region37
  $region36: #{concat_model_forward.2} parent=0 // pred_region
    _
  $region37: #{concat_model_forward.2} parent=0 // pred_fallthru
    _
  // Predicated region
  $region38: #{concat_model_forward.2} parent=0 // pred_check
    _
  $region39: #{concat_model_forward.2} parent=0 // pred_check_branch
    %39 = sbr.rel (0) target = $region41
  $region40: #{concat_model_forward.2} parent=0 // pred_region
    _
  $region41: #{concat_model_forward.2} parent=0 // pred_fallthru
    _
  // Predicated region
  $region42: #{concat_model_forward.2} parent=0 // pred_check
    _
  $region43: #{concat_model_forward.2} parent=0 // pred_check_branch
    %41 = sbr.rel (0) target = $region45
  $region44: #{concat_model_forward.2} parent=0 // pred_region
    _
  $region45: #{concat_model_forward.2} parent=0 // pred_fallthru
    _
  // Predicated region
  $region46: #{concat_model_forward.2} parent=0 // pred_check
    _
  $region47: #{concat_model_forward.2} parent=0 // pred_check_branch
    %43 = sbr.rel (0) target = $region49
  $region48: #{concat_model_forward.2} parent=0 // pred_region
    _
  $region49: #{concat_model_forward.2} parent=0 // pred_fallthru
    _
  // Predicated region
  $region50: #{concat_model_forward.2} parent=0 // pred_check
    _
  $region51: #{concat_model_forward.2} parent=0 // pred_check_branch
    %45 = sbr.rel (0) target = $region53
  $region52: #{concat_model_forward.2} parent=0 // pred_region
    _
  $region53: #{concat_model_forward.2} parent=0 // pred_fallthru
    _
  // Predicated region
  $region54: #{concat_model_forward.2} parent=0 // pred_check
    _
  $region55: #{concat_model_forward.2} parent=0 // pred_check_branch
    %47 = sbr.rel (0) target = $region57
  $region56: #{concat_model_forward.2} parent=0 // pred_region
    _
  $region57: #{concat_model_forward.2} parent=0 // pred_fallthru
    _
  // Predicated region
  $region58: #{concat_model_forward.2} parent=0 // pred_check
    _
  $region59: #{concat_model_forward.2} parent=0 // pred_check_branch
    %49 = sbr.rel (0) target = $region61
  $region60: #{concat_model_forward.2} parent=0 // pred_region
    _
  $region61: #{concat_model_forward.2} parent=0 // pred_fallthru
    _
  %p51 = scmp.eq.s32.totalorder 0, 0
  // Predicated region
  $region62: #{concat_model_forward.2} parent=0 // pred_check
    %p52 = pneg %p51
  $region63: #{concat_model_forward.2} parent=0 // pred_check_branch
    %54 = sbr.rel (%p52) target = $region65
  $region64: #{concat_model_forward.2} parent=0 // pred_region
    %vm55 = vcmask 254976
    %56 = vst.msk [vmem:[#allocation2] sm:$0x3] %vm55, 0.0
  $region65: #{concat_model_forward.2} parent=0 // pred_fallthru
    _
  %v57 = vld [vmem:[#allocation2] sm:$0x3]
  %v58 = vld [vmem:[%s0] sm:$0x1]
  %v59 = vld [vmem:[%s1] sm:$0xf]
  %v60 = vld [vmem:[%s1 + $0x4] sm:$0xf]
  %v61 = vld [vmem:[%s1 + $0x8] sm:$0xf]
  %v62 = vld [vmem:[%s1 + $0xc] sm:$0xf]
  %v63 = vld [vmem:[%s1 + $0x10] sm:$0xf]
  %v64 = vld [vmem:[%s1 + $0x14] sm:$0xf]
  %v65 = vld [vmem:[%s1 + $0x18] sm:$0xf]
  %v66 = vld [vmem:[%s1 + $0x1c] sm:$0xf]
  %v67 = vld [vmem:[%s1 + $0x20] sm:$0xf]
  %v68 = vld [vmem:[%s1 + $0x24] sm:$0xf]
  %v69 = vld [vmem:[%s1 + $0x28] sm:$0xf]
  %v70 = vld [vmem:[%s1 + $0x2c] sm:$0xf]
  %v71 = vld [vmem:[%s1 + $0x30] sm:$0xf]
  %v72 = vld [vmem:[%s1 + $0x34] sm:$0xf]
  %v73 = vld [vmem:[%s1 + $0x38] sm:$0xf]
  %v74 = vld [vmem:[%s1 + $0x3c] sm:$0xf]
  %v91 = vunpack.c.l.b16 %v59
  %v92 = vunpack.c.l.b16 %v60
  %v93 = vunpack.c.l.b16 %v61
  %v94 = vunpack.c.l.b16 %v62
  %v95 = vunpack.c.l.b16 %v63
  %v96 = vunpack.c.l.b16 %v64
  %v97 = vunpack.c.l.b16 %v65
  %v98 = vunpack.c.l.b16 %v66
  %v99 = vunpack.c.l.b16 %v67
  %v100 = vunpack.c.l.b16 %v68
  %v101 = vunpack.c.l.b16 %v69
  %v102 = vunpack.c.l.b16 %v70
  %v103 = vunpack.c.l.b16 %v71
  %v104 = vunpack.c.l.b16 %v72
  %v105 = vunpack.c.l.b16 %v73
  %v106 = vunpack.c.l.b16 %v74
  %v107 = vpack.c.b16 %v92, %v91
  %v108 = vpack.c.b16 %v94, %v93
  %v109 = vpack.c.b16 %v96, %v95
  %v110 = vpack.c.b16 %v98, %v97
  %v111 = vpack.c.b16 %v100, %v99
  %v112 = vpack.c.b16 %v102, %v101
  %v113 = vpack.c.b16 %v104, %v103
  %v114 = vpack.c.b16 %v106, %v105
  %123 = vmatprep.subr.bf16.mxu0 0
  %124 = vmatpush1.bf16.msra.mxu0 %v107
  %125 = vmatprep.subr.bf16.mxu0 0
  %126 = vmatpush1.bf16.msra.mxu0 %v108
  %127 = vmatprep.subr.bf16.mxu0 0
  %128 = vmatpush1.bf16.msra.mxu0 %v109
  %129 = vmatprep.subr.bf16.mxu0 0
  %130 = vmatpush1.bf16.msra.mxu0 %v110
  %131 = vmatprep.subr.bf16.mxu0 0
  %132 = vmatpush1.bf16.msra.mxu0 %v111
  %133 = vmatprep.subr.bf16.mxu0 0
  %134 = vmatpush1.bf16.msra.mxu0 %v112
  %135 = vmatprep.subr.bf16.mxu0 0
  %136 = vmatpush1.bf16.msra.mxu0 %v113
  %137 = vmatprep.subr.bf16.mxu0 0
  %138 = vmatpush1.bf16.msra.mxu0 %v114
  %139 = vmatprep.subr.bf16.mxu0 0
  %140 = vmatpush1.bf16.msra.mxu0 0
  %141 = vmatprep.subr.bf16.mxu0 0
  %142 = vmatpush1.bf16.msra.mxu0 0
  %143 = vmatprep.subr.bf16.mxu0 0
  %144 = vmatpush1.bf16.msra.mxu0 0
  %145 = vmatprep.subr.bf16.mxu0 0
  %146 = vmatpush1.bf16.msra.mxu0 0
  %147 = vmatprep.subr.bf16.mxu0 0
  %148 = vmatpush1.bf16.msra.mxu0 0
  %149 = vmatprep.subr.bf16.mxu0 0
  %150 = vmatpush1.bf16.msra.mxu0 0
  %151 = vmatprep.subr.bf16.mxu0 0
  %152 = vmatpush1.bf16.msra.mxu0 0
  %153 = vmatprep.subr.bf16.mxu0 0
  %154 = vmatpush1.bf16.msra.mxu0 0
  %155 = vmatprep.mubr.bf16.mxu0 0
  %156 = vmatmul.mubr.bf16.gmra.mrb[0].mxu0 %v58
  %v157 = vpop.f32.mrb[0].mxu0
  %v158 = vadd.f32 0.0, %v157
  %v159 = vpop.f32.mrb[0].mxu0
  %v160 = vpop.f32.mrb[0].mxu0
  %v161 = vpop.f32.mrb[0].mxu0
  %162 = vdwg.mxu0
  %v163 = vadd.f32 %v57, %v158
  %vm164 = vcmask 254976
  %165 = vst.msk [vmem:[#allocation2] sm:$0x3] %vm164, %v163
  // Predicated region
  $region66: #{concat_model_forward.2} parent=0 // pred_check
    %p166 = pneg %p51
  $region67: #{concat_model_forward.2} parent=0 // pred_check_branch
    %168 = sbr.rel (%p166) target = $region69
  $region68: #{concat_model_forward.2} parent=0 // pred_region
    %v169 = vld [vmem:[#allocation2] sm:$0x3]
    %v170 = vld [vmem:[%s2] sm:$0x1]
    %v172 = vlaneseq
    %v173 = vshrl.u32 %v172, 7
    %v174 = vsub.s32 0, %v173
    %v175 = vrot.slane %v170, %v174
    %v177 = vadd.f32 %v169, %v175
    %v178 = vpack.c.bf16 %v177, %v177
    %v179 = vld [vmem:[%s6] sm:$0xf]
    %v180 = vld [vmem:[%s6 + $0x4] sm:$0xf]
    %v181 = vld [vmem:[%s6 + $0x8] sm:$0xf]
    %v182 = vld [vmem:[%s6 + $0xc] sm:$0xf]
    %v183 = vld [vmem:[%s7] sm:$0x1]
    %v185 = vlaneseq
    %v186 = vshrl.u32 %v185, 7
    %v187 = vsub.s32 0, %v186
    %v188 = vrot.slane %v183, %v187
    %v194 = vunpack.c.l.b16 %v179
    %v195 = vunpack.c.l.b16 %v180
    %v196 = vunpack.c.l.b16 %v181
    %v197 = vunpack.c.l.b16 %v182
    %v198 = vpack.c.b16 %v195, %v194
    %v199 = vpack.c.b16 %v197, %v196
    %vm202 = vcmask 261120
    %v204 = vsel %vm202, %v178, 0
    %206 = vmatprep.subr.bf16.mxu0 0
    %207 = vmatpush1.bf16.msra.mxu0 %v198
    %208 = vmatprep.subr.bf16.mxu0 0
    %209 = vmatpush1.bf16.msra.mxu0 %v199
    %210 = vmatprep.subr.bf16.mxu0 0
    %211 = vmatpush1.bf16.msra.mxu0 0
    %212 = vmatprep.subr.bf16.mxu0 0
    %213 = vmatpush1.bf16.msra.mxu0 0
    %214 = vmatprep.subr.bf16.mxu0 0
    %215 = vmatpush1.bf16.msra.mxu0 0
    %216 = vmatprep.subr.bf16.mxu0 0
    %217 = vmatpush1.bf16.msra.mxu0 0
    %218 = vmatprep.subr.bf16.mxu0 0
    %219 = vmatpush1.bf16.msra.mxu0 0
    %220 = vmatprep.subr.bf16.mxu0 0
    %221 = vmatpush1.bf16.msra.mxu0 0
    %222 = vmatprep.subr.bf16.mxu0 0
    %223 = vmatpush1.bf16.msra.mxu0 0
    %224 = vmatprep.subr.bf16.mxu0 0
    %225 = vmatpush1.bf16.msra.mxu0 0
    %226 = vmatprep.subr.bf16.mxu0 0
    %227 = vmatpush1.bf16.msra.mxu0 0
    %228 = vmatprep.subr.bf16.mxu0 0
    %229 = vmatpush1.bf16.msra.mxu0 0
    %230 = vmatprep.subr.bf16.mxu0 0
    %231 = vmatpush1.bf16.msra.mxu0 0
    %232 = vmatprep.subr.bf16.mxu0 0
    %233 = vmatpush1.bf16.msra.mxu0 0
    %234 = vmatprep.subr.bf16.mxu0 0
    %235 = vmatpush1.bf16.msra.mxu0 0
    %236 = vmatprep.subr.bf16.mxu0 0
    %237 = vmatpush1.bf16.msra.mxu0 0
    %238 = vmatprep.mubr.bf16.mxu0 0
    %239 = vmatmul.mubr.bf16.gmra.mrb[0].mxu0 %v204
    %v240 = vpop.f32.mrb[0].mxu0
    %v241 = vadd.f32 %v188, %v240
    %v242 = vpop.f32.mrb[0].mxu0
    %v243 = vpop.f32.mrb[0].mxu0
    %v244 = vpop.f32.mrb[0].mxu0
    %245 = vdwg.mxu0
    %v246 = vmul.f32 %v241, 0.5
    %v247 = vmul.f32 %v241, 0.70710677
    %v248 = verf.f32.pop %v247
    %v249 = vadd.f32 %v248, 1.0
    %v250 = vmul.f32 %v246, %v249
    %v251 = vpack.c.bf16 %v250, %v250
    %v252 = vld [vmem:[%s8] sm:$0xf]
    %v253 = vld [vmem:[%s8 + $0x4] sm:$0xf]
    %v254 = vld [vmem:[%s8 + $0x8] sm:$0xf]
    %v255 = vld [vmem:[%s8 + $0xc] sm:$0xf]
    %v256 = vld [vmem:[%s9] sm:$0x1]
    %v258 = vlaneseq
    %v259 = vshrl.u32 %v258, 7
    %v260 = vsub.s32 0, %v259
    %v261 = vrot.slane %v256, %v260
    %v267 = vunpack.c.l.b16 %v252
    %v268 = vunpack.c.l.b16 %v253
    %v269 = vunpack.c.l.b16 %v254
    %v270 = vunpack.c.l.b16 %v255
    %v271 = vpack.c.b16 %v268, %v267
    %v272 = vpack.c.b16 %v270, %v269
    %v276 = vsel %vm202, %v251, 0
    %278 = vmatprep.subr.bf16.mxu0 0
    %279 = vmatpush1.bf16.msra.mxu0 %v271
    %280 = vmatprep.subr.bf16.mxu0 0
    %281 = vmatpush1.bf16.msra.mxu0 %v272
    %282 = vmatprep.subr.bf16.mxu0 0
    %283 = vmatpush1.bf16.msra.mxu0 0
    %284 = vmatprep.subr.bf16.mxu0 0
    %285 = vmatpush1.bf16.msra.mxu0 0
    %286 = vmatprep.subr.bf16.mxu0 0
    %287 = vmatpush1.bf16.msra.mxu0 0
    %288 = vmatprep.subr.bf16.mxu0 0
    %289 = vmatpush1.bf16.msra.mxu0 0
    %290 = vmatprep.subr.bf16.mxu0 0
    %291 = vmatpush1.bf16.msra.mxu0 0
    %292 = vmatprep.subr.bf16.mxu0 0
    %293 = vmatpush1.bf16.msra.mxu0 0
    %294 = vmatprep.subr.bf16.mxu0 0
    %295 = vmatpush1.bf16.msra.mxu0 0
    %296 = vmatprep.subr.bf16.mxu0 0
    %297 = vmatpush1.bf16.msra.mxu0 0
    %298 = vmatprep.subr.bf16.mxu0 0
    %299 = vmatpush1.bf16.msra.mxu0 0
    %300 = vmatprep.subr.bf16.mxu0 0
    %301 = vmatpush1.bf16.msra.mxu0 0
    %302 = vmatprep.subr.bf16.mxu0 0
    %303 = vmatpush1.bf16.msra.mxu0 0
    %304 = vmatprep.subr.bf16.mxu0 0
    %305 = vmatpush1.bf16.msra.mxu0 0
    %306 = vmatprep.subr.bf16.mxu0 0
    %307 = vmatpush1.bf16.msra.mxu0 0
    %308 = vmatprep.subr.bf16.mxu0 0
    %309 = vmatpush1.bf16.msra.mxu0 0
    %310 = vmatprep.mubr.bf16.mxu0 0
    %311 = vmatmul.mubr.bf16.gmra.mrb[0].mxu0 %v276
    %v312 = vpop.f32.mrb[0].mxu0
    %v313 = vadd.f32 %v261, %v312
    %v314 = vpop.f32.mrb[0].mxu0
    %v315 = vpop.f32.mrb[0].mxu0
    %v316 = vpop.f32.mrb[0].mxu0
    %317 = vdwg.mxu0
    %v318 = vld [vmem:[%s3] sm:$0xf]
    %v319 = vld [vmem:[%s3 + $0x4] sm:$0xf]
    %v320 = vlaneseq
    %v321 = vand.u32 %v320, 127
    %v322 = vld [vmem:[%s4] sm:$0xf]
    %v323 = vld [vmem:[%s4 + $0x4] sm:$0xf]
    %v324 = vld [vmem:[%s4 + $0x8] sm:$0xf]
    %v325 = vld [vmem:[%s4 + $0xc] sm:$0xf]
    %v326 = vld [vmem:[%s5] sm:$0xff]
    %v327 = vld [vmem:[%s5 + $0x8] sm:$0xff]
    %v328 = vld [vmem:[%s5 + $0x10] sm:$0xff]
    %v329 = vld [vmem:[%s5 + $0x18] sm:$0xff]
    %331 = vset.pattern.permute.xlu0 0
    %332 = vperm.xlu0 %331, %v326
    %v333 = vpop.permute.xlu0 %332
    %336 = vset.pattern.permute.xlu0 0
    %337 = vperm.xlu0 %336, %v327
    %v338 = vpop.permute.xlu0 %337
    %341 = vset.pattern.permute.xlu0 0
    %342 = vperm.xlu0 %341, %v328
    %v343 = vpop.permute.xlu0 %342
    %346 = vset.pattern.permute.xlu0 0
    %347 = vperm.xlu0 %346, %v329
    %v348 = vpop.permute.xlu0 %347
    %v354 = vunpack.c.l.b16 %v322
    %v355 = vunpack.c.l.b16 %v323
    %v356 = vunpack.c.l.b16 %v324
    %v357 = vunpack.c.l.b16 %v325
    %v358 = vpack.c.b16 %v355, %v354
    %v359 = vpack.c.b16 %v357, %v356
    %v362 = vunpack.c.l.s4 1983009808
    %v363 = vunpack.c.0.s8 %v362
    %v364 = vlaneseq
    %v365 = vshrl.u32 %v364, 7
    %v366 = vsub.s32 %v363, %v365
    %v367 = vrot.slane %v318, %v366
    %v368 = vcombine.high %v367, %v367
    %vm369 = vcmask 31744
    %v371 = vsel %vm369, %v358, 0
    %v374 = vsel %vm369, %v359, 0
    %vm376 = vcmask 1041408
    %v378 = vsel %vm376, %v367, 0
    %v381 = vsel %vm376, %v368, 0
    %383 = vmatprep.subr.bf16.mxu0 %v381
    %384 = vmatpush1.bf16.msra.mxu0 %v378
    %385 = vmatprep.subr.bf16.mxu0 0
    %386 = vmatpush1.bf16.msra.mxu0 0
    %387 = vmatprep.subr.bf16.mxu0 0
    %388 = vmatpush1.bf16.msra.mxu0 0
    %389 = vmatprep.subr.bf16.mxu0 0
    %390 = vmatpush1.bf16.msra.mxu0 0
    %391 = vmatprep.subr.bf16.mxu0 0
    %392 = vmatpush1.bf16.msra.mxu0 0
    %393 = vmatprep.subr.bf16.mxu0 0
    %394 = vmatpush1.bf16.msra.mxu0 0
    %395 = vmatprep.subr.bf16.mxu0 0
    %396 = vmatpush1.bf16.msra.mxu0 0
    %397 = vmatprep.subr.bf16.mxu0 0
    %398 = vmatpush1.bf16.msra.mxu0 0
    %399 = vmatprep.subr.bf16.mxu0 0
    %400 = vmatpush1.bf16.msra.mxu0 0
    %401 = vmatprep.subr.bf16.mxu0 0
    %402 = vmatpush1.bf16.msra.mxu0 0
    %403 = vmatprep.subr.bf16.mxu0 0
    %404 = vmatpush1.bf16.msra.mxu0 0
    %405 = vmatprep.subr.bf16.mxu0 0
    %406 = vmatpush1.bf16.msra.mxu0 0
    %407 = vmatprep.subr.bf16.mxu0 0
    %408 = vmatpush1.bf16.msra.mxu0 0
    %409 = vmatprep.subr.bf16.mxu0 0
    %410 = vmatpush1.bf16.msra.mxu0 0
    %411 = vmatprep.subr.bf16.mxu0 0
    %412 = vmatpush1.bf16.msra.mxu0 0
    %413 = vmatprep.subr.bf16.mxu0 0
    %414 = vmatpush1.bf16.msra.mxu0 0
    %415 = vmatprep.mubr.bf16.mxu0 0
    %416 = vmatmul.mubr.bf16.gmra.mrb[0].mxu0 %v371
    %v417 = vpop.f32.mrb[0].mxu0
    %v418 = vadd.f32 %v333, %v417
    %v419 = vpop.f32.mrb[0].mxu0
    %v420 = vadd.f32 %v333, %v419
    %v421 = vpop.f32.mrb[0].mxu0
    %v422 = vadd.f32 %v338, %v421
    %v423 = vpop.f32.mrb[0].mxu0
    %v424 = vadd.f32 %v338, %v423
    %425 = vmatprep.mubr.bf16.mxu0 0
    %426 = vmatmul.mubr.bf16.gmra.mrb[0].mxu0 %v374
    %v427 = vpop.f32.mrb[0].mxu0
    %v428 = vadd.f32 %v343, %v427
    %v429 = vpop.f32.mrb[0].mxu0
    %v430 = vadd.f32 %v343, %v429
    %v431 = vpop.f32.mrb[0].mxu0
    %v432 = vadd.f32 %v348, %v431
    %v433 = vpop.f32.mrb[0].mxu0
    %v434 = vadd.f32 %v348, %v433
    %435 = vdwg.mxu0
    %v436 = vmax.f32 %v418, 0.0
    %v437 = vmax.f32 %v420, 0.0
    %v438 = vmax.f32 %v422, 0.0
    %v439 = vmax.f32 %v424, 0.0
    %v440 = vmax.f32 %v428, 0.0
    %v441 = vmax.f32 %v430, 0.0
    %v442 = vmax.f32 %v432, 0.0
    %v443 = vmax.f32 %v434, 0.0
    %v444 = vadd.f32 %v436, %v437
    %445 = vadd.xlane.f32.xlu0 %v444
    %v446 = vpop.xlane.xlu0 %445
    %v447 = vadd.f32 %v438, %v439
    %448 = vadd.xlane.f32.xlu0 %v447
    %v449 = vpop.xlane.xlu0 %448
    %v450 = vadd.f32 %v440, %v441
    %451 = vadd.xlane.f32.xlu0 %v450
    %v452 = vpop.xlane.xlu0 %451
    %v453 = vadd.f32 %v442, %v443
    %454 = vadd.xlane.f32.xlu0 %v453
    %v455 = vpop.xlane.xlu0 %454
    %v456 = vrcp.pop 256.0
    %v457 = vmul.f32 %v446, %v456
    %v458 = vmul.f32 %v449, %v456
    %v459 = vmul.f32 %v452, %v456
    %v460 = vmul.f32 %v455, %v456
    %vm461 = vcmp.eq.s32.totalorder %v321, 0
    %v462 = vsel %vm461, %v457, 0.0
    %v463 = vsel %vm461, %v458, 0.0
    %v464 = vsel %vm461, %v459, 0.0
    %v465 = vsel %vm461, %v460, 0.0
    %v466 = vadd.f32 %v462, 0.0
    %v467 = vadd.f32 %v463, 0.0
    %v468 = vadd.f32 %v464, 0.0
    %v469 = vadd.f32 %v465, 0.0
    %v472 = vunpack.c.l.s4 1983009808
    %v473 = vunpack.c.0.s8 %v472
    %v474 = vlaneseq
    %v475 = vshrl.u32 %v474, 7
    %v476 = vsub.s32 %v473, %v475
    %v477 = vrot.slane %v319, %v476
    %v478 = vcombine.high %v477, %v477
    %v480 = vsel %vm376, %v477, 0
    %v483 = vsel %vm376, %v478, 0
    %485 = vmatprep.subr.bf16.mxu0 %v483
    %486 = vmatpush1.bf16.msra.mxu0 %v480
    %487 = vmatprep.subr.bf16.mxu0 0
    %488 = vmatpush1.bf16.msra.mxu0 0
    %489 = vmatprep.subr.bf16.mxu0 0
    %490 = vmatpush1.bf16.msra.mxu0 0
    %491 = vmatprep.subr.bf16.mxu0 0
    %492 = vmatpush1.bf16.msra.mxu0 0
    %493 = vmatprep.subr.bf16.mxu0 0
    %494 = vmatpush1.bf16.msra.mxu0 0
    %495 = vmatprep.subr.bf16.mxu0 0
    %496 = vmatpush1.bf16.msra.mxu0 0
    %497 = vmatprep.subr.bf16.mxu0 0
    %498 = vmatpush1.bf16.msra.mxu0 0
    %499 = vmatprep.subr.bf16.mxu0 0
    %500 = vmatpush1.bf16.msra.mxu0 0
    %501 = vmatprep.subr.bf16.mxu0 0
    %502 = vmatpush1.bf16.msra.mxu0 0
    %503 = vmatprep.subr.bf16.mxu0 0
    %504 = vmatpush1.bf16.msra.mxu0 0
    %505 = vmatprep.subr.bf16.mxu0 0
    %506 = vmatpush1.bf16.msra.mxu0 0
    %507 = vmatprep.subr.bf16.mxu0 0
    %508 = vmatpush1.bf16.msra.mxu0 0
    %509 = vmatprep.subr.bf16.mxu0 0
    %510 = vmatpush1.bf16.msra.mxu0 0
    %511 = vmatprep.subr.bf16.mxu0 0
    %512 = vmatpush1.bf16.msra.mxu0 0
    %513 = vmatprep.subr.bf16.mxu0 0
    %514 = vmatpush1.bf16.msra.mxu0 0
    %515 = vmatprep.subr.bf16.mxu0 0
    %516 = vmatpush1.bf16.msra.mxu0 0
    %517 = vmatprep.mubr.bf16.mxu0 0
    %518 = vmatmul.mubr.bf16.gmra.mrb[0].mxu0 %v371
    %v519 = vpop.f32.mrb[0].mxu0
    %v520 = vadd.f32 %v333, %v519
    %v521 = vpop.f32.mrb[0].mxu0
    %v522 = vadd.f32 %v333, %v521
    %v523 = vpop.f32.mrb[0].mxu0
    %v524 = vadd.f32 %v338, %v523
    %v525 = vpop.f32.mrb[0].mxu0
    %v526 = vadd.f32 %v338, %v525
    %527 = vmatprep.mubr.bf16.mxu0 0
    %528 = vmatmul.mubr.bf16.gmra.mrb[0].mxu0 %v374
    %v529 = vpop.f32.mrb[0].mxu0
    %v530 = vadd.f32 %v343, %v529
    %v531 = vpop.f32.mrb[0].mxu0
    %v532 = vadd.f32 %v343, %v531
    %v533 = vpop.f32.mrb[0].mxu0
    %v534 = vadd.f32 %v348, %v533
    %v535 = vpop.f32.mrb[0].mxu0
    %v536 = vadd.f32 %v348, %v535
    %537 = vdwg.mxu0
    %v538 = vmax.f32 %v520, 0.0
    %v539 = vmax.f32 %v522, 0.0
    %v540 = vmax.f32 %v524, 0.0
    %v541 = vmax.f32 %v526, 0.0
    %v542 = vmax.f32 %v530, 0.0
    %v543 = vmax.f32 %v532, 0.0
    %v544 = vmax.f32 %v534, 0.0
    %v545 = vmax.f32 %v536, 0.0
    %v546 = vadd.f32 %v538, %v539
    %547 = vadd.xlane.f32.xlu0 %v546
    %v548 = vpop.xlane.xlu0 %547
    %v549 = vadd.f32 %v540, %v541
    %550 = vadd.xlane.f32.xlu0 %v549
    %v551 = vpop.xlane.xlu0 %550
    %v552 = vadd.f32 %v542, %v543
    %553 = vadd.xlane.f32.xlu0 %v552
    %v554 = vpop.xlane.xlu0 %553
    %v555 = vadd.f32 %v544, %v545
    %556 = vadd.xlane.f32.xlu0 %v555
    %v557 = vpop.xlane.xlu0 %556
    %v558 = vmul.f32 %v548, %v456
    %v559 = vmul.f32 %v551, %v456
    %v560 = vmul.f32 %v554, %v456
    %v561 = vmul.f32 %v557, %v456
    %vm562 = vcmp.eq.s32.totalorder %v321, 1
    %v563 = vsel %vm562, %v558, 0.0
    %v564 = vsel %vm562, %v559, 0.0
    %v565 = vsel %vm562, %v560, 0.0
    %v566 = vsel %vm562, %v561, 0.0
    %v567 = vadd.f32 %v466, %v563
    %v568 = vadd.f32 %v467, %v564
    %v569 = vadd.f32 %v468, %v565
    %v570 = vadd.f32 %v469, %v566
    %571 = vxpose.xlu0.b32.start [1/16] %v567, 128
    %572 = vxpose.xlu0.b32.cont [2/16] %v568, 128
    %573 = vxpose.xlu0.b32.cont [3/16] %v569, 128
    %574 = vxpose.xlu0.b32.cont [4/16] %v570, 128
    %575 = vxpose.xlu0.b32.cont [5/16] 0.0, 128
    %576 = vxpose.xlu0.b32.cont [6/16] 0.0, 128
    %577 = vxpose.xlu0.b32.cont [7/16] 0.0, 128
    %578 = vxpose.xlu0.b32.cont [8/16] 0.0, 128
    %579 = vxpose.xlu0.b32.cont [9/16] 0.0, 128
    %580 = vxpose.xlu0.b32.cont [10/16] 0.0, 128
    %581 = vxpose.xlu0.b32.cont [11/16] 0.0, 128
    %582 = vxpose.xlu0.b32.cont [12/16] 0.0, 128
    %583 = vxpose.xlu0.b32.cont [13/16] 0.0, 128
    %584 = vxpose.xlu0.b32.cont [14/16] 0.0, 128
    %585 = vxpose.xlu0.b32.cont [15/16] 0.0, 128
    %586 = vxpose.xlu0.b32.end [16/16] 0.0, 128
    %v587 = vpop.trf.xlu0
    %v588 = vpop.trf.xlu0
    %v589 = vpop.trf.xlu0
    %v590 = vpop.trf.xlu0
    %v591 = vpop.trf.xlu0
    %v592 = vpop.trf.xlu0
    %v593 = vpop.trf.xlu0
    %v594 = vpop.trf.xlu0
    %v595 = vpop.trf.xlu0
    %v596 = vpop.trf.xlu0
    %v597 = vpop.trf.xlu0
    %v598 = vpop.trf.xlu0
    %v599 = vpop.trf.xlu0
    %v600 = vpop.trf.xlu0
    %v601 = vpop.trf.xlu0
    %v602 = vpop.trf.xlu0
    %v603 = vpack.c.bf16 %v313, %v313
    %v604 = vld [vmem:[%s10] sm:$0xf]
    %v605 = vld [vmem:[%s10 + $0x4] sm:$0xf]
    %v606 = vld [vmem:[%s10 + $0x8] sm:$0xf]
    %v607 = vld [vmem:[%s10 + $0xc] sm:$0xf]
    %v608 = vpack.c.bf16 %v587, %v587
    %v609 = vld [vmem:[%s11] sm:$0xf]
    %v610 = vld [vmem:[%s11 + $0x4] sm:$0xf]
    %v611 = vld [vmem:[%s11 + $0x8] sm:$0xf]
    %v612 = vld [vmem:[%s11 + $0xc] sm:$0xf]
    %v617 = vunpack.c.l.b16 %v609
    %v618 = vunpack.c.l.b16 %v610
    %v619 = vunpack.c.l.b16 %v611
    %v620 = vunpack.c.l.b16 %v612
    %v621 = vpack.c.b16 %v618, %v617
    %v622 = vpack.c.b16 %v620, %v619
    %v626 = vsel %vm202, %v608, 0
    %628 = vmatprep.subr.bf16.mxu0 0
    %629 = vmatpush1.bf16.msra.mxu0 %v621
    %630 = vmatprep.subr.bf16.mxu0 0
    %631 = vmatpush1.bf16.msra.mxu0 %v622
    %632 = vmatprep.subr.bf16.mxu0 0
    %633 = vmatpush1.bf16.msra.mxu0 0
    %634 = vmatprep.subr.bf16.mxu0 0
    %635 = vmatpush1.bf16.msra.mxu0 0
    %636 = vmatprep.subr.bf16.mxu0 0
    %637 = vmatpush1.bf16.msra.mxu0 0
    %638 = vmatprep.subr.bf16.mxu0 0
    %639 = vmatpush1.bf16.msra.mxu0 0
    %640 = vmatprep.subr.bf16.mxu0 0
    %641 = vmatpush1.bf16.msra.mxu0 0
    %642 = vmatprep.subr.bf16.mxu0 0
    %643 = vmatpush1.bf16.msra.mxu0 0
    %644 = vmatprep.subr.bf16.mxu0 0
    %645 = vmatpush1.bf16.msra.mxu0 0
    %646 = vmatprep.subr.bf16.mxu0 0
    %647 = vmatpush1.bf16.msra.mxu0 0
    %648 = vmatprep.subr.bf16.mxu0 0
    %649 = vmatpush1.bf16.msra.mxu0 0
    %650 = vmatprep.subr.bf16.mxu0 0
    %651 = vmatpush1.bf16.msra.mxu0 0
    %652 = vmatprep.subr.bf16.mxu0 0
    %653 = vmatpush1.bf16.msra.mxu0 0
    %654 = vmatprep.subr.bf16.mxu0 0
    %655 = vmatpush1.bf16.msra.mxu0 0
    %656 = vmatprep.subr.bf16.mxu0 0
    %657 = vmatpush1.bf16.msra.mxu0 0
    %658 = vmatprep.subr.bf16.mxu0 0
    %659 = vmatpush1.bf16.msra.mxu0 0
    %660 = vmatprep.mubr.bf16.mxu0 0
    %661 = vmatmul.mubr.bf16.gmra.mrb[0].mxu0 %v626
    %v662 = vpop.f32.mrb[0].mxu0
    %v663 = vadd.f32 0.0, %v662
    %v664 = vpop.f32.mrb[0].mxu0
    %v665 = vpop.f32.mrb[0].mxu0
    %v666 = vpop.f32.mrb[0].mxu0
    %667 = vdwg.mxu0
    %v672 = vunpack.c.l.b16 %v604
    %v673 = vunpack.c.l.b16 %v605
    %v674 = vunpack.c.l.b16 %v606
    %v675 = vunpack.c.l.b16 %v607
    %v676 = vpack.c.b16 %v673, %v672
    %v677 = vpack.c.b16 %v675, %v674
    %v681 = vsel %vm202, %v603, 0
    %683 = vmatprep.subr.bf16.mxu0 0
    %684 = vmatpush1.bf16.msra.mxu0 %v676
    %685 = vmatprep.subr.bf16.mxu0 0
    %686 = vmatpush1.bf16.msra.mxu0 %v677
    %687 = vmatprep.subr.bf16.mxu0 0
    %688 = vmatpush1.bf16.msra.mxu0 0
    %689 = vmatprep.subr.bf16.mxu0 0
    %690 = vmatpush1.bf16.msra.mxu0 0
    %691 = vmatprep.subr.bf16.mxu0 0
    %692 = vmatpush1.bf16.msra.mxu0 0
    %693 = vmatprep.subr.bf16.mxu0 0
    %694 = vmatpush1.bf16.msra.mxu0 0
    %695 = vmatprep.subr.bf16.mxu0 0
    %696 = vmatpush1.bf16.msra.mxu0 0
    %697 = vmatprep.subr.bf16.mxu0 0
    %698 = vmatpush1.bf16.msra.mxu0 0
    %699 = vmatprep.subr.bf16.mxu0 0
    %700 = vmatpush1.bf16.msra.mxu0 0
    %701 = vmatprep.subr.bf16.mxu0 0
    %702 = vmatpush1.bf16.msra.mxu0 0
    %703 = vmatprep.subr.bf16.mxu0 0
    %704 = vmatpush1.bf16.msra.mxu0 0
    %705 = vmatprep.subr.bf16.mxu0 0
    %706 = vmatpush1.bf16.msra.mxu0 0
    %707 = vmatprep.subr.bf16.mxu0 0
    %708 = vmatpush1.bf16.msra.mxu0 0
    %709 = vmatprep.subr.bf16.mxu0 0
    %710 = vmatpush1.bf16.msra.mxu0 0
    %711 = vmatprep.subr.bf16.mxu0 0
    %712 = vmatpush1.bf16.msra.mxu0 0
    %713 = vmatprep.subr.bf16.mxu0 0
    %714 = vmatpush1.bf16.msra.mxu0 0
    %715 = vmatprep.mubr.bf16.mxu0 0
    %716 = vmatmul.mubr.bf16.gmra.mrb[0].mxu0 %v681
    %v717 = vpop.f32.mrb[0].mxu0
    %v718 = vadd.f32 %v663, %v717
    %v719 = vpop.f32.mrb[0].mxu0
    %v720 = vpop.f32.mrb[0].mxu0
    %v721 = vpop.f32.mrb[0].mxu0
    %722 = vdwg.mxu0
    %v723 = vld [vmem:[%s12] sm:$0x1]
    %v725 = vlaneseq
    %v726 = vshrl.u32 %v725, 7
    %v727 = vsub.s32 0, %v726
    %v728 = vrot.slane %v723, %v727
    %v730 = vadd.f32 %v718, %v728
    %v731 = vsel %vm376, %v730, 0.0
    %732 = vadd.xlane.f32.xlu0 %v731
    %v733 = vpop.xlane.xlu0 %732
    %v734 = vrcp.pop 128.0
    %v735 = vmul.f32 %v733, %v734
    %v736 = vsub.f32 %v730, %v735
    %v737 = vmul.f32 %v736, %v736
    %v738 = vsel %vm376, %v737, 0.0
    %739 = vadd.xlane.f32.xlu0 %v738
    %v740 = vpop.xlane.xlu0 %739
    %v741 = vmul.f32 %v740, %v734
    %v742 = vadd.f32 %v741, 1e-05
    %v743 = vrsqrt.pop %v742
    %v744 = vmul.f32 %v736, %v743
    %v745 = vld [vmem:[%s13] sm:$0x1]
    %v747 = vlaneseq
    %v748 = vshrl.u32 %v747, 7
    %v749 = vsub.s32 0, %v748
    %v750 = vrot.slane %v745, %v749
    %v752 = vmul.f32 %v744, %v750
    %v753 = vld [vmem:[%s14] sm:$0x1]
    %v755 = vlaneseq
    %v756 = vshrl.u32 %v755, 7
    %v757 = vsub.s32 0, %v756
    %v758 = vrot.slane %v753, %v757
    %v760 = vadd.f32 %v752, %v758
    %v761 = vmax.f32 %v760, 0.0
    %762 = vst [vmem:[%s15] sm:$0x3] %v761
  $region69: #{concat_model_forward.2} parent=0 // pred_fallthru
    _
  // Predicated region
  $region70: #{concat_model_forward.2} parent=0 // pred_check
    _
  $region71: #{concat_model_forward.2} parent=0 // pred_check_branch
    %764 = sbr.rel (0) target = $region73
  $region72: #{concat_model_forward.2} parent=0 // pred_region
    _
  $region73: #{concat_model_forward.2} parent=0 // pred_fallthru
    _
  // Predicated region
  $region74: #{concat_model_forward.2} parent=0 // pred_check
    _
  $region75: #{concat_model_forward.2} parent=0 // pred_check_branch
    %766 = sbr.rel (0) target = $region77
  $region76: #{concat_model_forward.2} parent=0 // pred_region
    _
  $region77: #{concat_model_forward.2} parent=0 // pred_fallthru
    _

</llo_original>
